<compile_context>
chip_gen: v6e
topology: v6e:2x2x1
jax: 0.10.0
libtpu: 0.0.40
codegen_flags: <defaults>
</compile_context>

<pallas_src>
import numpy as np
import jax
import jax.numpy as jnp
from jax.experimental import pallas as pl
from jax.experimental.pallas import tpu as pltpu

_LANE = 128
_STEP_OVERHEAD_BYTES = 64 * 1024     # heuristic per-grid-step cost in byte-equivalents


def _round_up(x, m):
    return ((x + m - 1) // m) * m


# ----------------------------- Pallas kernel ------------------------------ #
def sparse_linear_kernel(tid_ref, nof_ref, kof_ref, first_ref, last_ref,
                         x_ref, wt_ref, b_ref, o_ref):
    # grid = (M tiles, flat nonzero-weight-tile axis)
    t = pl.program_id(1)
    k = kof_ref[t]                                       # K tile of the resident x
    contrib = jnp.dot(x_ref[k], wt_ref[0], preferred_element_type=jnp.float32)

    @pl.when(first_ref[t] == 1)                          # first tile of this column
    def _init():
        o_ref[...] = contrib

    @pl.when(first_ref[t] == 0)                          # accumulate in resident block
    def _accum():
        o_ref[...] += contrib

    @pl.when(last_ref[t] == 1)                           # last tile: add bias once
    def _finalize():
        o_ref[...] = o_ref[...] + b_ref[...]


# -------------------------- parameter setup (host) ------------------------- #
def build_transposed_weight(indices, values, arr_size1, arr_size2, graph_size=None):
    """Densify the expanded sparse matrix, transposed: W^T of shape (size1, size2)."""
    idx = np.asarray(indices, dtype=np.int64)
    if graph_size is None:
        graph_size = int(idx.max()) + 1
    size1 = graph_size * arr_size1
    size2 = graph_size * arr_size2
    E = idx.shape[1]
    rows, cols = idx[0], idx[1]                  # rows -> size2 axis, cols -> size1 axis
    ii = np.arange(arr_size1)
    jj = np.arange(arr_size2)
    exp_rows = rows[:, None, None] * arr_size2 + jj[None, None, :]   # (E, 1, a2)
    exp_cols = cols[:, None, None] * arr_size1 + ii[None, :, None]   # (E, a1, 1)
    exp_rows = np.broadcast_to(exp_rows, (E, arr_size1, arr_size2)).reshape(-1)
    exp_cols = np.broadcast_to(exp_cols, (E, arr_size1, arr_size2)).reshape(-1)
    # values ordering in PyTorch: for edge e: for i: for j  ->  e*a1*a2 + i*a2 + j
    vals = np.asarray(values, dtype=np.float32).reshape(-1)
    WT = np.zeros((size1, size2), np.float32)
    np.add.at(WT, (exp_cols, exp_rows), vals)    # duplicate indices sum (spmm semantics)
    return WT, size1, size2, graph_size


def _select_tiles(WT, size1, size2):
    """Pick (tk, tn) minimizing streamed weight bytes + per-step overhead."""
    best = None
    for ck in (512, 256, 128):
        for cn in (512, 256, 128):
            Kp, Np = _round_up(size1, ck), _round_up(size2, cn)
            Wp = np.zeros((Kp, Np), np.float32)
            Wp[:size1, :size2] = WT
            nz = np.abs(Wp).reshape(Kp // ck, ck, Np // cn, cn).sum(axis=(1, 3)) > 0
            cnt = max(int(nz.sum()), 1)
            cost = cnt * (ck * cn * 2 + _STEP_OVERHEAD_BYTES)
            if best is None or cost < best[0]:       # large->small order => ties keep larger
                best = (cost, ck, cn)
    return best[1], best[2]


def prepare_sparse_linear(indices, values, b, arr_size1, arr_size2, graph_size=None):
    """One-time setup: packed nonzero bf16 weight super-tiles + flat prefetch tables."""
    WT, size1, size2, graph_size = build_transposed_weight(
        indices, values, arr_size1, arr_size2, graph_size)

    tk, tn = _select_tiles(WT, size1, size2)
    K_pad, N_pad = _round_up(size1, tk), _round_up(size2, tn)
    nk, nn = K_pad // tk, N_pad // tn

    WT_pad = np.zeros((K_pad, N_pad), np.float32)
    WT_pad[:size1, :size2] = WT
    tile_nz = np.abs(WT_pad).reshape(nk, tk, nn, tn).sum(axis=(1, 3)) > 0

    # Flat enumeration of nonzero super-tiles (column-major over output columns) and
    # contiguous packing of those tiles.
    tiles = []
    tid_of, nof, kof, first_of, last_of = [], [], [], [], []
    need_zero = False
    for col in range(nn):
        ks = np.nonzero(tile_nz[:, col])[0]
        if ks.size == 0:
            # empty output column: single shared zero tile so bias still gets written
            need_zero = True
            tid_of.append(-1)
            nof.append(col); kof.append(0); first_of.append(1); last_of.append(1)
        else:
            for idx, kb in enumerate(ks):
                tid_of.append(len(tiles))
                tiles.append(WT_pad[kb * tk:(kb + 1) * tk, col * tn:(col + 1) * tn])
                nof.append(col)
                kof.append(int(kb))
                first_of.append(1 if idx == 0 else 0)
                last_of.append(1 if idx == ks.size - 1 else 0)
    nnz_tiles = len(tiles)
    zero_id = len(tiles)
    if need_zero:
        tiles.append(np.zeros((tk, tn), np.float32))
    tid_of = [zero_id if t < 0 else t for t in tid_of]
    wt_packed = np.stack(tiles, axis=0)                   # (n_packed, tk, tn), contiguous

    b_np = np.asarray(b, dtype=np.float32).reshape(-1)
    b_pad = np.zeros((1, N_pad), np.float32)
    b_pad[0, :size2] = b_np

    return dict(
        size1=size1, size2=size2, graph_size=graph_size,
        K_pad=K_pad, N_pad=N_pad, tk=tk, tn=tn, nk=nk, nn=nn,
        T=len(tid_of), nnz_tiles=nnz_tiles,
        WT_f32=jnp.asarray(WT),                                 # reference only
        wt_packed=jnp.asarray(wt_packed, jnp.bfloat16),         # streamed by the kernel
        b_pad=jnp.asarray(b_pad),                               # f32, added at finalize
        tid_of=jnp.asarray(tid_of, jnp.int32),                  # SMEM prefetch tables
        nof=jnp.asarray(nof, jnp.int32),
        kof=jnp.asarray(kof, jnp.int32),
        first_of=jnp.asarray(first_of, jnp.int32),
        last_of=jnp.asarray(last_of, jnp.int32),
    )


# -------------------------------- forward ---------------------------------- #
def sparse_linear_forward(x, params):
    """x: (B, size1, 1) f32 -> (B, size2, 1) f32."""
    B = x.shape[0]
    size1, size2 = params["size1"], params["size2"]
    K_pad, N_pad = params["K_pad"], params["N_pad"]
    tk, tn, nk = params["tk"], params["tn"], params["nk"]
    T = params["T"]

    # bf16 native sublane packing wants >=16 rows; single M tile when possible so each
    # weight tile is streamed from HBM exactly once.
    B_pad = _round_up(B, 16)
    if B_pad <= 512:
        tm, nm = B_pad, 1
    else:
        tm = 512
        B_pad = _round_up(B_pad, tm)
        nm = B_pad // tm

    x2 = x.reshape(B, size1).astype(jnp.bfloat16)
    x_pad = jnp.zeros((B_pad, K_pad), jnp.bfloat16).at[:B, :size1].set(x2)
    x3 = x_pad.reshape(B_pad, nk, tk).transpose(1, 0, 2)        # (nk, B_pad, tk) resident

    # scalar-prefetch-aware index maps (tables arrive as trailing SMEM refs)
    x_spec = pl.BlockSpec((nk, tm, tk),
                          lambda i, t, tid, nof, kof, fst, lst: (0, i, 0))
    wt_spec = pl.BlockSpec((1, tk, tn),
                           lambda i, t, tid, nof, kof, fst, lst: (tid[t], 0, 0))
    b_spec = pl.BlockSpec((1, tn),
                          lambda i, t, tid, nof, kof, fst, lst: (0, nof[t]))
    o_spec = pl.BlockSpec((tm, tn),
                          lambda i, t, tid, nof, kof, fst, lst: (i, nof[t]))

    # advisory cost estimate (flops: no extra nm factor -- B_pad already covers M tiling)
    flops = int(2 * B_pad * tk * tn * T)
    bytes_accessed = int(x3.size * 2                        # resident bf16 activations
                         + nm * T * tk * tn * 2             # contiguous weight tiles
                         + N_pad * 4 + B_pad * N_pad * 4)   # bias + output

    # VMEM budget: resident x + double-buffered weight tile + output block + bias
    vmem_need = 2 * (nk * tm * tk * 2 + tk * tn * 2 + tm * tn * 4 + tn * 4)
    vmem_limit = int(min(64 * 1024 * 1024, max(32 * 1024 * 1024, 2 * vmem_need)))

    y = pl.pallas_call(
        sparse_linear_kernel,
        out_shape=jax.ShapeDtypeStruct((B_pad, N_pad), jnp.float32),
        grid_spec=pltpu.PrefetchScalarGridSpec(
            num_scalar_prefetch=5,
            grid=(nm, T),
            in_specs=[x_spec, wt_spec, b_spec],
            out_specs=o_spec,
        ),
        compiler_params=pltpu.CompilerParams(
            dimension_semantics=("parallel", "arbitrary"),
            vmem_limit_bytes=vmem_limit),
        cost_estimate=pl.CostEstimate(
            flops=flops, transcendentals=0, bytes_accessed=bytes_accessed),
    )(params["tid_of"], params["nof"], params["kof"],
      params["first_of"], params["last_of"],
      x3, params["wt_packed"], params["b_pad"])

    return y[:B, :size2][..., None]                          # (B, size2, 1)


# ---------------------------------- main ------------------------------------ #
if __name__ == "__main__":
    key = jax.random.PRNGKey(0)
    k_vals, k_bias, k_x = jax.random.split(key, 3)

    # small graph: 8 nodes, 10 edges; block sizes 4x4  ->  W is (32, 32)
    arr_size1, arr_size2 = 4, 4
    indices = jnp.array(
        [[0, 1, 2, 3, 4, 5, 6, 7, 0, 2],
         [1, 2, 3, 4, 5, 6, 7, 0, 3, 5]], dtype=jnp.int32)            # (2, E)
    E = indices.shape[1]
    graph_size = 8
    size1 = graph_size * arr_size1                                     # 32
    size2 = graph_size * arr_size2                                     # 32

    # deterministic parameter init mirroring __init__
    # (torch.nn.init.uniform_ overrides the earlier init -> values ~ U(0, 1))
    values = jax.random.uniform(k_vals, (E * arr_size1 * arr_size2,),
                                jnp.float32, 0.0, 1.0)
    # b ~ U(-1/len(indices), 1/len(indices)) = U(-0.5, 0.5)
    b = jax.random.uniform(k_bias, (size2,), jnp.float32, -0.5, 0.5)

    params = prepare_sparse_linear(indices, values, b, arr_size1, arr_size2,
                                   graph_size=graph_size)

    # input: batch of column vectors, (B, size1, 1)
    B = 2
    x = jax.random.normal(k_x, (B, size1, 1), jnp.float32)

    y = sparse_linear_forward(x, params)
    y = jax.block_until_ready(y)
    assert y.shape == (B, size2, 1)

    # references
    WT = params["WT_f32"]                           # (size1, size2) f32
    x2 = x[..., 0]
    y_f32 = (x2 @ WT)[..., None] + b[None, :, None]                    # module semantics
    x_bf = x2.astype(jnp.bfloat16).astype(jnp.float32)
    wt_bf = WT.astype(jnp.bfloat16).astype(jnp.float32)
    y_bf16 = (x_bf @ wt_bf)[..., None] + b[None, :, None]              # kernel numerics

    assert jnp.allclose(y, y_bf16, atol=2e-3, rtol=2e-3), \
        f"max|diff| vs bf16 ref = {float(jnp.max(jnp.abs(y - y_bf16)))}"
    assert jnp.allclose(y, y_f32, atol=5e-2, rtol=5e-2), \
        f"max|diff| vs f32 ref = {float(jnp.max(jnp.abs(y - y_f32)))}"

    print("KERNEL_OK")
</pallas_src>

<mosaic_0001>
module attributes {stable_mosaic.version = 11 : i64} {
  func.func @sparse_linear_kernel(%arg0: i32, %arg1: i32, %arg2: memref<1xi32, #tpu.memory_space<smem>>, %arg3: memref<1xi32, #tpu.memory_space<smem>>, %arg4: memref<1xi32, #tpu.memory_space<smem>>, %arg5: memref<1xi32, #tpu.memory_space<smem>>, %arg6: memref<1xi32, #tpu.memory_space<smem>>, %arg7: memref<1x16x128xbf16, #tpu.memory_space<vmem>>, %arg8: memref<1x128x128xbf16, #tpu.memory_space<vmem>>, %arg9: memref<1x128xf32, #tpu.memory_space<vmem>>, %arg10: memref<16x128xf32, #tpu.memory_space<vmem>>) attributes {dimension_semantics = [#tpu.dimension_semantics<parallel>, #tpu.dimension_semantics<arbitrary>], iteration_bounds = array<i64: 1, 1>, scalar_prefetch = 5 : i64, scratch_operands = 0 : i64, tpu.core_type = #tpu.core_type<tc>, window_params = [{transform_indices = @transform_0, window_bounds = array<i64: 1, 16, 128>}, {transform_indices = @transform_1, window_bounds = array<i64: 1, 128, 128>}, {transform_indices = @transform_2, window_bounds = array<i64: 1, 128>}, {transform_indices = @transform_3, window_bounds = array<i64: 16, 128>}]} {
    %0 = arith.index_cast %arg1 : i32 to index
    %1 = memref.load %arg4[%0] : memref<1xi32, #tpu.memory_space<smem>>
    %2 = arith.index_cast %1 : i32 to index
    %c0 = arith.constant 0 : index
    %c0_0 = arith.constant 0 : index
    %3 = vector.load %arg7[%2, %c0, %c0_0] : memref<1x16x128xbf16, #tpu.memory_space<vmem>>, vector<1x16x128xbf16>
    %4 = vector.shape_cast %3 : vector<1x16x128xbf16> to vector<16x128xbf16>
    %c0_1 = arith.constant 0 : index
    %c0_2 = arith.constant 0 : index
    %c0_3 = arith.constant 0 : index
    %5 = vector.load %arg8[%c0_1, %c0_2, %c0_3] : memref<1x128x128xbf16, #tpu.memory_space<vmem>>, vector<1x128x128xbf16>
    %6 = vector.shape_cast %5 : vector<1x128x128xbf16> to vector<128x128xbf16>
    %cst = arith.constant dense<0.000000e+00> : vector<16x128xf32>
    %7 = tpu.matmul %4, %6, %cst {dimension_numbers = #tpu.dot_dimension_numbers<[1], [0], [0], [1], [0, 0, 1, 1], [], []>} : vector<16x128xbf16>, vector<128x128xbf16>, vector<16x128xf32> -> vector<16x128xf32>
    %8 = arith.index_cast %arg1 : i32 to index
    %9 = memref.load %arg5[%8] : memref<1xi32, #tpu.memory_space<smem>>
    %c1_i32 = arith.constant 1 : i32
    %10 = arith.cmpi eq, %9, %c1_i32 : i32
    %11 = arith.extui %10 : i1 to i32
    %c0_i32 = arith.constant 0 : i32
    %12 = arith.cmpi ne, %11, %c0_i32 : i32
    scf.if %12 {
      %c0_8 = arith.constant 0 : index
      %c0_9 = arith.constant 0 : index
      %23 = vector.load %arg10[%c0_8, %c0_9] : memref<16x128xf32, #tpu.memory_space<vmem>>, vector<16x128xf32>
      tpu.vector_store %arg10[%c0_8, %c0_9], %7 {strides = array<i32>} : memref<16x128xf32, #tpu.memory_space<vmem>>, vector<16x128xf32>,
    } else {
    }
    %13 = arith.index_cast %arg1 : i32 to index
    %14 = memref.load %arg5[%13] : memref<1xi32, #tpu.memory_space<smem>>
    %c0_i32_4 = arith.constant 0 : i32
    %15 = arith.cmpi eq, %14, %c0_i32_4 : i32
    %16 = arith.extui %15 : i1 to i32
    %c0_i32_5 = arith.constant 0 : i32
    %17 = arith.cmpi ne, %16, %c0_i32_5 : i32
    scf.if %17 {
      %c0_8 = arith.constant 0 : index
      %c0_9 = arith.constant 0 : index
      %23 = vector.load %arg10[%c0_8, %c0_9] : memref<16x128xf32, #tpu.memory_space<vmem>>, vector<16x128xf32>
      %24 = arith.addf %23, %7 : vector<16x128xf32>
      %c0_10 = arith.constant 0 : index
      %c0_11 = arith.constant 0 : index
      %25 = vector.load %arg10[%c0_10, %c0_11] : memref<16x128xf32, #tpu.memory_space<vmem>>, vector<16x128xf32>
      tpu.vector_store %arg10[%c0_10, %c0_11], %24 {strides = array<i32>} : memref<16x128xf32, #tpu.memory_space<vmem>>, vector<16x128xf32>,
    } else {
    }
    %18 = arith.index_cast %arg1 : i32 to index
    %19 = memref.load %arg6[%18] : memref<1xi32, #tpu.memory_space<smem>>
    %c1_i32_6 = arith.constant 1 : i32
    %20 = arith.cmpi eq, %19, %c1_i32_6 : i32
    %21 = arith.extui %20 : i1 to i32
    %c0_i32_7 = arith.constant 0 : i32
    %22 = arith.cmpi ne, %21, %c0_i32_7 : i32
    scf.if %22 {
      %c0_8 = arith.constant 0 : index
      %c0_9 = arith.constant 0 : index
      %23 = vector.load %arg10[%c0_8, %c0_9] : memref<16x128xf32, #tpu.memory_space<vmem>>, vector<16x128xf32>
      %c0_10 = arith.constant 0 : index
      %c0_11 = arith.constant 0 : index
      %24 = vector.load %arg9[%c0_10, %c0_11] : memref<1x128xf32, #tpu.memory_space<vmem>>, vector<1x128xf32>
      %25 = vector.broadcast %24 : vector<1x128xf32> to vector<16x128xf32>
      %26 = arith.addf %23, %25 : vector<16x128xf32>
      %c0_12 = arith.constant 0 : index
      %c0_13 = arith.constant 0 : index
      %27 = vector.load %arg10[%c0_12, %c0_13] : memref<16x128xf32, #tpu.memory_space<vmem>>, vector<16x128xf32>
      tpu.vector_store %arg10[%c0_12, %c0_13], %26 {strides = array<i32>} : memref<16x128xf32, #tpu.memory_space<vmem>>, vector<16x128xf32>,
    } else {
    }
    return
  }
  func.func @transform_0(%arg0: i32, %arg1: i32, %arg2: memref<1xi32, #tpu.memory_space<smem>>, %arg3: memref<1xi32, #tpu.memory_space<smem>>, %arg4: memref<1xi32, #tpu.memory_space<smem>>, %arg5: memref<1xi32, #tpu.memory_space<smem>>, %arg6: memref<1xi32, #tpu.memory_space<smem>>) -> (i32, i32, i32) {
    %c0_i32 = arith.constant 0 : i32
    %c0_i32_0 = arith.constant 0 : i32
    %c0_i32_1 = arith.constant 0 : i32
    return %c0_i32, %arg0, %c0_i32_0 : i32, i32, i32
  }
  func.func @transform_1(%arg0: i32, %arg1: i32, %arg2: memref<1xi32, #tpu.memory_space<smem>>, %arg3: memref<1xi32, #tpu.memory_space<smem>>, %arg4: memref<1xi32, #tpu.memory_space<smem>>, %arg5: memref<1xi32, #tpu.memory_space<smem>>, %arg6: memref<1xi32, #tpu.memory_space<smem>>) -> (i32, i32, i32) {
    %0 = arith.index_cast %arg1 : i32 to index
    %1 = memref.load %arg2[%0] : memref<1xi32, #tpu.memory_space<smem>>
    %c0_i32 = arith.constant 0 : i32
    %c0_i32_0 = arith.constant 0 : i32
    %c0_i32_1 = arith.constant 0 : i32
    return %1, %c0_i32, %c0_i32_0 : i32, i32, i32
  }
  func.func @transform_2(%arg0: i32, %arg1: i32, %arg2: memref<1xi32, #tpu.memory_space<smem>>, %arg3: memref<1xi32, #tpu.memory_space<smem>>, %arg4: memref<1xi32, #tpu.memory_space<smem>>, %arg5: memref<1xi32, #tpu.memory_space<smem>>, %arg6: memref<1xi32, #tpu.memory_space<smem>>) -> (i32, i32) {
    %0 = arith.index_cast %arg1 : i32 to index
    %1 = memref.load %arg3[%0] : memref<1xi32, #tpu.memory_space<smem>>
    %c0_i32 = arith.constant 0 : i32
    %c0_i32_0 = arith.constant 0 : i32
    return %c0_i32, %1 : i32, i32
  }
  func.func @transform_3(%arg0: i32, %arg1: i32, %arg2: memref<1xi32, #tpu.memory_space<smem>>, %arg3: memref<1xi32, #tpu.memory_space<smem>>, %arg4: memref<1xi32, #tpu.memory_space<smem>>, %arg5: memref<1xi32, #tpu.memory_space<smem>>, %arg6: memref<1xi32, #tpu.memory_space<smem>>) -> (i32, i32) {
    %0 = arith.index_cast %arg1 : i32 to index
    %1 = memref.load %arg3[%0] : memref<1xi32, #tpu.memory_space<smem>>
    %c0_i32 = arith.constant 0 : i32
    return %arg0, %1 : i32, i32
  }
}

</mosaic_0001>

<llo_original>
// kernel: tpu_custom_call.1
$region0: #{tpu_custom_call.1}
  #allocation0 [shape = 'u32[]', space=smem, size = 0x4, offset = 0x4, fixed_abs, tag = 'smem constant byte address 0x4 - core index']
  #allocation1 [shape = 'u32[144,128]{1,0:T(1,128)}', space=vmem, size = 0x12000, scoped, tag = 'internal scratch']
  #allocation2 [shape = 's32[1]{0}', space=sflag, size = 0x4, scoped, tag = 'scoped memory for tpu_custom_call.1']
  #allocation3 [shape = 's32[1]{0:T(128)S(6)}', space=smem, size = 0x200, scoped, tag = 'prefetched SMEM operand 0']
  #allocation4 [shape = 's32[1]{0:T(128)S(6)}', space=smem, size = 0x200, scoped, tag = 'prefetched SMEM operand 1']
  #allocation5 [shape = 's32[1]{0:T(128)S(6)}', space=smem, size = 0x200, scoped, tag = 'prefetched SMEM operand 2']
  #allocation6 [shape = 's32[1]{0:T(128)S(6)}', space=smem, size = 0x200, scoped, tag = 'prefetched SMEM operand 3']
  #allocation7 [shape = 's32[1]{0:T(128)S(6)}', space=smem, size = 0x200, scoped, tag = 'prefetched SMEM operand 4']
  %s0 = inlined_call_operand.<no memory space> [shape: s32[1], index: 0, kind: input, shape index: {}]
  %s1 = inlined_call_operand.<no memory space> [shape: s32[1], index: 1, kind: input, shape index: {}]
  %s2 = inlined_call_operand.<no memory space> [shape: s32[1], index: 2, kind: input, shape index: {}]
  %s3 = inlined_call_operand.<no memory space> [shape: s32[1], index: 3, kind: input, shape index: {}]
  %s4 = inlined_call_operand.<no memory space> [shape: s32[1], index: 4, kind: input, shape index: {}]
  %s5 = inlined_call_operand.vmem [shape: bf16[1,16,128], index: 5, kind: input, shape index: {}]
  %s6 = inlined_call_operand.hbm [shape: bf16[1,128,128], index: 6, kind: input, shape index: {}]
  %s7 = inlined_call_operand.vmem [shape: f32[1,128], index: 7, kind: input, shape index: {}]
  %s8 = inlined_call_operand.hbm [shape: f32[16,128], index: 8, kind: output, shape index: {}]
  %s9 = sld [smem:[#allocation0]]
  $region38: #{tpu_custom_call.1} parent=0
    _
  %s11 = ssub.s32 1, %s9
  %s12 = scalar_select 0, %s11, %s9
  %13 = sst [smem:[#allocation3]] %s0
  %14 = sst [smem:[#allocation4]] %s1
  %15 = sst [smem:[#allocation5]] %s2
  %16 = sst [smem:[#allocation6]] %s3
  %17 = sst [smem:[#allocation7]] %s4
  $region1: #{tpu_custom_call.1} parent=0
    #allocation8 [shape = 'u8[32768]{0}', space=vmem, size = 0x8000, scoped, tag = 'input window, operand 6, single buffered']
    #allocation9 [shape = 's32[1]{0}', space=sflag, size = 0x4, scoped, tag = 'scoped memory for tpu_custom_call.1']
    #allocation10 [shape = 's32[1]{0}', space=sflag, size = 0x4, scoped, tag = 'scoped memory for tpu_custom_call.1']
    #allocation11 [shape = 'u8[8192]{0}', space=vmem, size = 0x2000, scoped, tag = 'output window, operand 0, single buffered']
    %18 = vsyncpa [#allocation9], 0
    %19 = vsyncpa [#allocation10], 0
    // Predicated region
    $region2: #{tpu_custom_call.1} parent=1 // pred_check
      _
    $region3: #{tpu_custom_call.1} parent=1 // pred_check_branch
      %21 = sbr.rel (0) target = $region5
    $region4: #{tpu_custom_call.1} parent=1 // pred_region
      _
    $region5: #{tpu_custom_call.1} parent=1 // pred_fallthru
      _
    // Predicated region
    $region6: #{tpu_custom_call.1} parent=1 // pred_check
      _
    $region7: #{tpu_custom_call.1} parent=1 // pred_check_branch
      %23 = sbr.rel (0) target = $region9
    $region8: #{tpu_custom_call.1} parent=1 // pred_region
      %s24 = sld [smem:[#allocation3]]
      %s26 = ssub.s32 1024, 1024
      %27 = vsyncadd [#allocation9], %s26
      %s28 = smul.addr %s24, 16
      %s29 = smul.addr %s28, 64
      %s30 = scalar_lea.hbm %s6, %s29
      %s31 = sshll.u32 [#allocation8], 4
      %s32 = int_to_ptr.vmem [resolvable:$true] %s31
      %37 = dma.hbm_to_vmem [thread:$0]  %s30, 1024, %s32, [#allocation9], 64, 64, 4
    $region9: #{tpu_custom_call.1} parent=1 // pred_fallthru
      _
    // Predicated region
    $region10: #{tpu_custom_call.1} parent=1 // pred_check
      _
    $region11: #{tpu_custom_call.1} parent=1 // pred_check_branch
      %39 = sbr.rel (0) target = $region13
    $region12: #{tpu_custom_call.1} parent=1 // pred_region
      %s40 = sld [smem:[#allocation4]]
      %p41 = scmp.lt.s32.totalorder %s40, 0
      %s42 = scalar_select %p41, %s40, 0
      %s43 = scalar_lea.vmem %s7, %s42
      %s44 = sld [smem:[#allocation4]]
    $region13: #{tpu_custom_call.1} parent=1 // pred_fallthru
      _
    // Predicated region
    $region14: #{tpu_custom_call.1} parent=1 // pred_check
      _
    $region15: #{tpu_custom_call.1} parent=1 // pred_check_branch
      %46 = sbr.rel (0) target = $region17
    $region16: #{tpu_custom_call.1} parent=1 // pred_region
      %47 = dma.done [#allocation9], 1024
    $region17: #{tpu_custom_call.1} parent=1 // pred_fallthru
      _
    %s48 = sld [smem:[#allocation4]]
    %p49 = scmp.lt.s32.totalorder %s48, 0
    %s50 = scalar_select %p49, %s48, 0
    %s51 = scalar_lea.vmem %s7, %s50
    %s52 = sld [smem:[#allocation3]]
    %s53 = sld [smem:[#allocation4]]
    %p54 = scmp.lt.s32.totalorder %s53, 0
    %s55 = scalar_select %p54, %s53, 0
    %s56 = scalar_lea.vmem %s7, %s55
    %s57 = sld [smem:[#allocation4]]
    %s58 = sld [smem:[#allocation4]]
    %s60 = sld [smem:[#allocation5]]
    %s61 = smul.u32 %s60, 2
    %s62 = smul.addr %s61, 4
    %s63 = scalar_lea.vmem %s5, %s62
    %v64 = vld [vmem:[%s63] sm:$0xf]
    %v65 = vld [vmem:[%s63 + $0x4] sm:$0xf]
    %v66 = vld [vmem:[#allocation8] sm:$0xf]
    %v67 = vld [vmem:[#allocation8 + $0x4] sm:$0xf]
    %v68 = vld [vmem:[#allocation8 + $0x8] sm:$0xf]
    %v69 = vld [vmem:[#allocation8 + $0xc] sm:$0xf]
    %v70 = vld [vmem:[#allocation8 + $0x10] sm:$0xf]
    %v71 = vld [vmem:[#allocation8 + $0x14] sm:$0xf]
    %v72 = vld [vmem:[#allocation8 + $0x18] sm:$0xf]
    %v73 = vld [vmem:[#allocation8 + $0x1c] sm:$0xf]
    %v74 = vld [vmem:[#allocation8 + $0x20] sm:$0xf]
    %v75 = vld [vmem:[#allocation8 + $0x24] sm:$0xf]
    %v76 = vld [vmem:[#allocation8 + $0x28] sm:$0xf]
    %v77 = vld [vmem:[#allocation8 + $0x2c] sm:$0xf]
    %v78 = vld [vmem:[#allocation8 + $0x30] sm:$0xf]
    %v79 = vld [vmem:[#allocation8 + $0x34] sm:$0xf]
    %v80 = vld [vmem:[#allocation8 + $0x38] sm:$0xf]
    %v81 = vld [vmem:[#allocation8 + $0x3c] sm:$0xf]
    %v84 = vunpack.c.l.b16 %v64
    %v85 = vunpack.c.l.b16 %v65
    %v86 = vpack.c.b16 %v85, %v84
    %v104 = vunpack.c.l.b16 %v66
    %v105 = vunpack.c.l.b16 %v67
    %v106 = vunpack.c.l.b16 %v68
    %v107 = vunpack.c.l.b16 %v69
    %v108 = vunpack.c.l.b16 %v70
    %v109 = vunpack.c.l.b16 %v71
    %v110 = vunpack.c.l.b16 %v72
    %v111 = vunpack.c.l.b16 %v73
    %v112 = vunpack.c.l.b16 %v74
    %v113 = vunpack.c.l.b16 %v75
    %v114 = vunpack.c.l.b16 %v76
    %v115 = vunpack.c.l.b16 %v77
    %v116 = vunpack.c.l.b16 %v78
    %v117 = vunpack.c.l.b16 %v79
    %v118 = vunpack.c.l.b16 %v80
    %v119 = vunpack.c.l.b16 %v81
    %v120 = vpack.c.b16 %v105, %v104
    %v121 = vpack.c.b16 %v107, %v106
    %v122 = vpack.c.b16 %v109, %v108
    %v123 = vpack.c.b16 %v111, %v110
    %v124 = vpack.c.b16 %v113, %v112
    %v125 = vpack.c.b16 %v115, %v114
    %v126 = vpack.c.b16 %v117, %v116
    %v127 = vpack.c.b16 %v119, %v118
    %136 = vmatprep.subr.bf16.mxu0 0
    %137 = vmatpush1.bf16.msra.mxu0 %v127
    %138 = vmatprep.subr.bf16.mxu0 0
    %139 = vmatpush1.bf16.msra.mxu0 %v126
    %140 = vmatprep.subr.bf16.mxu0 0
    %141 = vmatpush1.bf16.msra.mxu0 %v125
    %142 = vmatprep.subr.bf16.mxu0 0
    %143 = vmatpush1.bf16.msra.mxu0 %v124
    %144 = vmatprep.subr.bf16.mxu0 0
    %145 = vmatpush1.bf16.msra.mxu0 %v123
    %146 = vmatprep.subr.bf16.mxu0 0
    %147 = vmatpush1.bf16.msra.mxu0 %v122
    %148 = vmatprep.subr.bf16.mxu0 0
    %149 = vmatpush1.bf16.msra.mxu0 %v121
    %150 = vmatprep.subr.bf16.mxu0 0
    %151 = vmatpush1.bf16.msra.mxu0 %v120
    %152 = vmatprep.subr.bf16.mxu0 0
    %153 = vmatpush2.bf16.msra.mxu0 0
    %154 = vmatprep.subr.bf16.mxu0 0
    %155 = vmatpush2.bf16.msra.mxu0 0
    %156 = vmatprep.subr.bf16.mxu0 0
    %157 = vmatpush2.bf16.msra.mxu0 0
    %158 = vmatprep.subr.bf16.mxu0 0
    %159 = vmatpush2.bf16.msra.mxu0 0
    %160 = vmatprep.subr.bf16.mxu0 0
    %161 = vmatpush2.bf16.msra.mxu0 0
    %162 = vmatprep.subr.bf16.mxu0 0
    %163 = vmatpush2.bf16.msra.mxu0 0
    %164 = vmatprep.subr.bf16.mxu0 0
    %165 = vmatpush2.bf16.msra.mxu0 0
    %166 = vmatprep.subr.bf16.mxu0 0
    %167 = vmatpush2.bf16.msra.mxu0 0
    %168 = vmatprep.mubr.bf16.mxu0 0
    %169 = vmatmul.mubr.bf16.gmra.mxu0 %v86
    %v170 = vpop.f32.mrf.mxu0
    %v171 = vadd.f32 0.0, %v170
    %v172 = vpop.f32.mrf.mxu0
    %v173 = vpop.f32.mrf.mxu0
    %v174 = vadd.f32 0.0, %v173
    %v175 = vpop.f32.mrf.mxu0
    %176 = vdwg.mxu0
    %s177 = sld [smem:[#allocation6]]
    %p178 = scmp.eq.s32.totalorder %s177, 1
    // Predicated region
    $region18: #{tpu_custom_call.1} parent=1 // pred_check
      %p179 = pneg %p178
    $region19: #{tpu_custom_call.1} parent=1 // pred_check_branch
      %181 = sbr.rel (%p179) target = $region21
    $region20: #{tpu_custom_call.1} parent=1 // pred_region
      %182 = vst [vmem:[#allocation11] sm:$0xff] %v171
      %183 = vst [vmem:[#allocation11 + $0x8] sm:$0xff] %v174
    $region21: #{tpu_custom_call.1} parent=1 // pred_fallthru
      _
    %s184 = sld [smem:[#allocation6]]
    %p185 = scmp.eq.s32.totalorder %s184, 0
    // Predicated region
    $region22: #{tpu_custom_call.1} parent=1 // pred_check
      %p186 = pneg %p185
    $region23: #{tpu_custom_call.1} parent=1 // pred_check_branch
      %188 = sbr.rel (%p186) target = $region25
    $region24: #{tpu_custom_call.1} parent=1 // pred_region
      %v189 = vld [vmem:[#allocation11] sm:$0xff]
      %v190 = vld [vmem:[#allocation11 + $0x8] sm:$0xff]
      %v191 = vadd.f32 %v189, %v171
      %v192 = vadd.f32 %v190, %v174
      %193 = vst [vmem:[#allocation11] sm:$0xff] %v191
      %194 = vst [vmem:[#allocation11 + $0x8] sm:$0xff] %v192
    $region25: #{tpu_custom_call.1} parent=1 // pred_fallthru
      _
    %s195 = sld [smem:[#allocation7]]
    %p196 = scmp.eq.s32.totalorder %s195, 1
    // Predicated region
    $region26: #{tpu_custom_call.1} parent=1 // pred_check
      %p197 = pneg %p196
    $region27: #{tpu_custom_call.1} parent=1 // pred_check_branch
      %199 = sbr.rel (%p197) target = $region29
    $region28: #{tpu_custom_call.1} parent=1 // pred_region
      %v200 = vld [vmem:[#allocation11] sm:$0xff]
      %v201 = vld [vmem:[#allocation11 + $0x8] sm:$0xff]
      %v202 = vld [vmem:[%s56] sm:$0x1]
      %v204 = vlaneseq
      %v205 = vshrl.u32 %v204, 7
      %v206 = vsub.s32 0, %v205
      %v207 = vrot.slane %v202, %v206
      %v209 = vadd.f32 %v200, %v207
      %v210 = vadd.f32 %v201, %v207
      %211 = vst [vmem:[#allocation11] sm:$0xff] %v209
      %212 = vst [vmem:[#allocation11 + $0x8] sm:$0xff] %v210
    $region29: #{tpu_custom_call.1} parent=1 // pred_fallthru
      _
    // Predicated region
    $region30: #{tpu_custom_call.1} parent=1 // pred_check
      _
    $region31: #{tpu_custom_call.1} parent=1 // pred_check_branch
      %214 = sbr.rel (0) target = $region33
    $region32: #{tpu_custom_call.1} parent=1 // pred_region
      %s215 = sld [smem:[#allocation4]]
      %s217 = ssub.s32 256, 256
      %218 = vsyncadd [#allocation10], %s217
      %s219 = smul.addr %s215, 128
      %s220 = scalar_lea.hbm %s8, %s219
      %s221 = sshll.u32 [#allocation11], 4
      %s222 = int_to_ptr.vmem [resolvable:$true] %s221
      %227 = dma.vmem_to_hbm [thread:$0]  %s222, 256, %s220, [#allocation10], 128, 128, 8
    $region33: #{tpu_custom_call.1} parent=1 // pred_fallthru
      _
    // Predicated region
    $region34: #{tpu_custom_call.1} parent=1 // pred_check
      _
    $region35: #{tpu_custom_call.1} parent=1 // pred_check_branch
      %229 = sbr.rel (0) target = $region37
    $region36: #{tpu_custom_call.1} parent=1 // pred_region
      %230 = dma.done [#allocation10], 256
    $region37: #{tpu_custom_call.1} parent=1 // pred_fallthru
      _
    %231 = vsyncpa [#allocation9], 1
    %232 = vsyncpa [#allocation10], 1

</llo_original>
